<compile_context>
chip_gen: v5e
topology: v5e:2x2
jax: 0.10.0
libtpu: 0.0.40
codegen_flags: <defaults>
</compile_context>

<pallas_src>
import math

import jax
import jax.numpy as jnp
from jax.experimental import pallas as pl
from jax.experimental.pallas import tpu as pltpu


# ----------------------------------------------------------------------------
# Kernel
# ----------------------------------------------------------------------------
def _fused_param_heads_kernel(params_ref, x_ref, w_ref, o_ref):
    """One grid step: a (TB, D) batch tile -> (TB, H) bounded parameter values.

    params_ref : VMEM f32[8, H]  rows: 0=bias 1=clamp_lo 2=clamp_hi 3=min 4=(max-min)
    x_ref      : VMEM [TB, D]    batch tile of features (f32 or bf16)
    w_ref      : VMEM [D, H]     all head weights, stacked column-wise (same dtype as x)
    o_ref      : VMEM f32[TB, H] scaled parameter predictions
    """
    params = params_ref[...]
    bias = params[0:1, :]
    lo = params[1:2, :]
    hi = params[2:3, :]
    mn = params[3:4, :]
    span = params[4:5, :]

    # [TB, D] @ [D, H] on the MXU, f32 accumulate; bf16 inputs go in natively.
    raw = jnp.dot(x_ref[...], w_ref[...], preferred_element_type=jnp.float32) + bias
    bounded = jnp.clip(raw, lo, hi)          # no-op when lo/hi are +-inf
    o_ref[...] = mn + span * jax.nn.sigmoid(bounded)


# ----------------------------------------------------------------------------
# Tile / VMEM budgeting (generation aware)
# ----------------------------------------------------------------------------
_X_PIPELINE_DEPTH = 3          # buffers requested for the streamed x input
_MAX_BATCH_TILE = 4096         # rows; upper bound on a single x block


def _vmem_limit_bytes():
    """Scoped-VMEM limit: half of physical VMEM (64 MiB v5e/v6e, 32 MiB v7x)."""
    try:
        cap = int(pltpu.get_tpu_info().vmem_capacity_bytes)
    except Exception:
        cap = 64 * 1024 * 1024          # conservative fallback (v7x physical)
    return max(16 * 1024 * 1024, min(cap // 2, 64 * 1024 * 1024))


def _round_up8(n):
    return int(((int(n) + 7) // 8) * 8)


def _choose_batch_tile(batch, input_dim, itemsize, vmem_limit):
    """Pick the streamed x tile height (rows, multiple of 8)."""
    # Budget ~60% of the scoped VMEM limit for the x pipeline; the rest covers
    # the resident weight/params tiles, the (tiny) output buffers and scratch.
    per_buf = max(1 << 20, int(0.6 * vmem_limit) // _X_PIPELINE_DEPTH)
    row_bytes = max(1, int(input_dim) * int(itemsize))
    tb = per_buf // row_bytes
    tb = int(min(_MAX_BATCH_TILE, max(8, tb)))
    tb -= tb % 8

    if batch <= 8:
        return 8
    # Guarantee >= 2 grid steps so "parallel" spans both TensorCores on v7x
    # (one extra ~0.35us step on single-TC chips — harmless).
    half = _round_up8(-(-batch // 2))
    return max(8, min(tb, half))


# ----------------------------------------------------------------------------
# Wrapper
# ----------------------------------------------------------------------------
def fused_parameter_heads_forward(x, weight, params, batch_tile=None):
    """x: [B, D]; weight: f32[D, H]; params: f32[8, H]  ->  f32[B, H]."""
    batch, input_dim = x.shape
    num_heads = weight.shape[1]

    # Match the resident weight's dtype to x once here (bf16 x -> bf16 weights)
    # instead of casting every streamed x tile inside the kernel.
    if x.dtype == jnp.float32:
        w = weight.astype(jnp.float32)
    else:
        w = weight.astype(x.dtype)

    vmem_limit = _vmem_limit_bytes()
    if batch_tile is None:
        tb = _choose_batch_tile(batch, input_dim, x.dtype.itemsize, vmem_limit)
    else:
        tb = max(8, int(batch_tile) - int(batch_tile) % 8)

    num_steps = pl.cdiv(batch, tb)
    # Depth-3 x pipeline only pays off with enough steps; otherwise default.
    x_buffers = _X_PIPELINE_DEPTH if num_steps >= 3 else 2

    out = pl.pallas_call(
        _fused_param_heads_kernel,
        out_shape=jax.ShapeDtypeStruct((batch, num_heads), jnp.float32),
        grid_spec=pltpu.PrefetchScalarGridSpec(
            num_scalar_prefetch=0,
            grid=(num_steps,),
            in_specs=[
                # per-head scalars: resident across all grid steps
                pl.BlockSpec((8, num_heads), lambda i: (0, 0)),
                # x: streamed batch tiles, multi-buffered DMA pipeline
                pl.BlockSpec(
                    (tb, input_dim),
                    lambda i: (i, 0),
                    pipeline_mode=pl.Buffered(x_buffers),
                ),
                # stacked weights: resident across all grid steps
                pl.BlockSpec((input_dim, num_heads), lambda i: (0, 0)),
            ],
            out_specs=pl.BlockSpec((tb, num_heads), lambda i: (i, 0)),
        ),
        compiler_params=pltpu.CompilerParams(
            dimension_semantics=("parallel",),     # megacore-shard batch on v7x
            vmem_limit_bytes=vmem_limit,
        ),
    )(params, x, w)
    return out


class FusedParameterHeadsPallas:
    """Several ParameterHeads fused into a single Pallas call.

    Each head is an nn.Linear(input_dim, 1) + bounded-sigmoid rescale; the
    weights are stacked into [D, H] and all heads are evaluated with one read
    of x, producing a lane-packed [B, H] output.
    """

    def __init__(self, input_dim, head_specs, key):
        # head_specs: sequence of (name, (min_val, max_val), init_value)
        self.input_dim = int(input_dim)
        self.names = [s[0] for s in head_specs]
        self.bounds = jnp.asarray(
            [[float(s[1][0]), float(s[1][1])] for s in head_specs], jnp.float32
        )  # [H, 2]
        num_heads = len(head_specs)

        # nn.Linear default init: U(-1/sqrt(in_features), 1/sqrt(in_features))
        bound = 1.0 / math.sqrt(input_dim)
        self.weight = jax.random.uniform(
            key, (input_dim, num_heads), minval=-bound, maxval=bound, dtype=jnp.float32
        )
        # bias deterministically overwritten (torch __init__ fill_)
        self.bias = jnp.asarray(
            [math.log((iv - lohi[0]) / (lohi[1] - iv)) for (_, lohi, iv) in head_specs],
            jnp.float32,
        )

    @property
    def num_heads(self):
        return self.weight.shape[1]

    def _pack_params(self, lo, hi):
        h = self.num_heads
        mn = self.bounds[:, 0]
        span = self.bounds[:, 1] - self.bounds[:, 0]
        rows = jnp.stack([self.bias, lo, hi, mn, span], axis=0)            # [5, H]
        return jnp.concatenate([rows, jnp.zeros((3, h), jnp.float32)], 0)  # [8, H]

    def __call__(self, x, trust_radius=None, phase_config=None, batch_tile=None):
        h = self.num_heads
        if trust_radius is not None and phase_config is not None:
            center = jnp.broadcast_to(
                jnp.asarray(phase_config["center"], jnp.float32), (h,)
            )
            radius = jnp.broadcast_to(
                jnp.asarray(phase_config["radius"], jnp.float32), (h,)
            ) * jnp.asarray(trust_radius, jnp.float32)
            lo, hi = center - radius, center + radius
        else:
            lo = jnp.full((h,), -jnp.inf, jnp.float32)
            hi = jnp.full((h,), jnp.inf, jnp.float32)
        params = self._pack_params(lo, hi)
        return fused_parameter_heads_forward(x, self.weight, params, batch_tile)


class ParameterHeadPallas:
    """Drop-in port of the single torch ParameterHead (fused kernel with H == 1)."""

    def __init__(self, input_dim, bounds, init_value, name, key):
        self._fused = FusedParameterHeadsPallas(
            input_dim, [(name, bounds, init_value)], key
        )
        self.bounds = (float(bounds[0]), float(bounds[1]))
        self.name = name

    @property
    def weight(self):
        return self._fused.weight

    @property
    def bias(self):
        return self._fused.bias

    def __call__(self, x, trust_radius=None, phase_config=None):
        return self._fused(x, trust_radius, phase_config)


# ----------------------------------------------------------------------------
# Pure-JAX reference
# ----------------------------------------------------------------------------
def _reference(weight, bias, bounds, x, trust_radius=None, phase_config=None):
    raw = x.astype(jnp.float32) @ weight.astype(jnp.float32) + bias          # [B, H]
    if trust_radius is not None and phase_config is not None:
        center = jnp.asarray(phase_config["center"], jnp.float32)
        radius = jnp.asarray(phase_config["radius"], jnp.float32) * jnp.asarray(
            trust_radius, jnp.float32
        )
        raw = jnp.clip(raw, center - radius, center + radius)
    mn = bounds[:, 0]
    mx = bounds[:, 1]
    return mn + (mx - mn) * jax.nn.sigmoid(raw)


if __name__ == "__main__":
    key = jax.random.PRNGKey(0)
    k_x, k_w, k_s = jax.random.split(key, 3)

    batch, input_dim = 128, 64
    x = jax.random.normal(k_x, (batch, input_dim), dtype=jnp.float32)

    # A small hypernetwork: 4 parameter heads fused into one kernel.
    head_specs = [
        ("learning_rate", (1e-4, 1e-1), 1e-2),
        ("momentum", (0.5, 0.999), 0.9),
        ("weight_decay", (1e-6, 1e-2), 1e-4),
        ("dropout", (0.0, 0.5), 0.1),
    ]
    fused = FusedParameterHeadsPallas(input_dim, head_specs, k_w)

    # Branch 1: no trust region (auto tile -> 2 grid steps for v7x coverage).
    out_plain = jax.block_until_ready(fused(x))

    # Branch 2: trust region enforcement, smaller explicit batch tile to
    # exercise the multi-step streaming pipeline with a ragged last block
    # (grid = (3,), last block masked; no wrapper pad of x).
    trust_radius = jnp.float32(0.5)
    phase_config = {"center": 0.0, "radius": 2.0}
    out_trust = jax.block_until_ready(
        fused(x, trust_radius=trust_radius, phase_config=phase_config, batch_tile=48)
    )

    ref_plain = _reference(fused.weight, fused.bias, fused.bounds, x)
    ref_trust = _reference(
        fused.weight, fused.bias, fused.bounds, x, trust_radius, phase_config
    )
    assert out_plain.shape == (batch, len(head_specs))
    assert out_trust.shape == (batch, len(head_specs))
    assert jnp.allclose(out_plain, ref_plain, atol=1e-5, rtol=1e-5)
    assert jnp.allclose(out_trust, ref_trust, atol=1e-5, rtol=1e-5)

    # bf16 input path: bf16 tiles go straight into the MXU with f32 accumulate.
    x_bf16 = x.astype(jnp.bfloat16)
    out_bf16 = jax.block_until_ready(fused(x_bf16))
    ref_bf16 = _reference(
        fused.weight.astype(jnp.bfloat16), fused.bias, fused.bounds, x_bf16
    )
    assert jnp.allclose(out_bf16, ref_bf16, atol=5e-3, rtol=5e-3)

    # Single-head drop-in (original torch module API); odd batch to exercise
    # the ragged-last-block (masked partial store) path without padding.
    single = ParameterHeadPallas(input_dim, (1e-4, 1e-1), 1e-2, "learning_rate", k_s)
    x_small = x[:9]
    out_single = jax.block_until_ready(
        single(x_small, trust_radius=trust_radius, phase_config=phase_config)
    )
    ref_single = _reference(
        single.weight,
        single.bias,
        jnp.asarray([[1e-4, 1e-1]], jnp.float32),
        x_small,
        trust_radius,
        phase_config,
    )
    assert out_single.shape == (9, 1)
    assert jnp.allclose(out_single, ref_single, atol=1e-5, rtol=1e-5)

    print("KERNEL_OK")
</pallas_src>

<mosaic_0001>
module attributes {stable_mosaic.version = 11 : i64} {
  func.func @_fused_param_heads_kernel(%arg0: i32, %arg1: memref<8x4xf32, #tpu.memory_space<vmem>>, %arg2: memref<64x64xf32, #tpu.memory_space<vmem>>, %arg3: memref<64x4xf32, #tpu.memory_space<vmem>>, %arg4: memref<64x4xf32, #tpu.memory_space<vmem>>) attributes {dimension_semantics = [#tpu.dimension_semantics<parallel>], iteration_bounds = array<i64: 2>, scalar_prefetch = 0 : i64, scratch_operands = 0 : i64, tpu.core_type = #tpu.core_type<tc>, window_params = [{pipeline_mode = #tpu.pipeline_mode<synchronous>, transform_indices = @transform_0, window_bounds = array<i64: 8, 4>}, {pipeline_mode = #tpu.pipeline_mode<double_buffered>, transform_indices = @transform_1, window_bounds = array<i64: 64, 64>}, {pipeline_mode = #tpu.pipeline_mode<synchronous>, transform_indices = @transform_2, window_bounds = array<i64: 64, 4>}, {transform_indices = @transform_3, window_bounds = array<i64: 64, 4>}]} {
    %c0 = arith.constant 0 : index
    %c0_0 = arith.constant 0 : index
    %0 = vector.load %arg1[%c0, %c0_0] : memref<8x4xf32, #tpu.memory_space<vmem>>, vector<8x4xf32>
    %1 = vector.extract_strided_slice %0 {offsets = [0, 0], sizes = [1, 4], strides = [1, 1]} : vector<8x4xf32> to vector<1x4xf32>
    %2 = vector.extract_strided_slice %0 {offsets = [1, 0], sizes = [1, 4], strides = [1, 1]} : vector<8x4xf32> to vector<1x4xf32>
    %3 = vector.extract_strided_slice %0 {offsets = [2, 0], sizes = [1, 4], strides = [1, 1]} : vector<8x4xf32> to vector<1x4xf32>
    %4 = vector.extract_strided_slice %0 {offsets = [3, 0], sizes = [1, 4], strides = [1, 1]} : vector<8x4xf32> to vector<1x4xf32>
    %5 = vector.extract_strided_slice %0 {offsets = [4, 0], sizes = [1, 4], strides = [1, 1]} : vector<8x4xf32> to vector<1x4xf32>
    %c0_1 = arith.constant 0 : index
    %c0_2 = arith.constant 0 : index
    %6 = vector.load %arg2[%c0_1, %c0_2] : memref<64x64xf32, #tpu.memory_space<vmem>>, vector<64x64xf32>
    %c0_3 = arith.constant 0 : index
    %c0_4 = arith.constant 0 : index
    %7 = vector.load %arg3[%c0_3, %c0_4] : memref<64x4xf32, #tpu.memory_space<vmem>>, vector<64x4xf32>
    %cst = arith.constant dense<0.000000e+00> : vector<64x4xf32>
    %8 = tpu.matmul %6, %7, %cst {dimension_numbers = #tpu.dot_dimension_numbers<[1], [0], [0], [1], [0, 0, 1, 1], [], []>} : vector<64x64xf32>, vector<64x4xf32>, vector<64x4xf32> -> vector<64x4xf32>
    %9 = vector.broadcast %1 : vector<1x4xf32> to vector<64x4xf32>
    %10 = arith.addf %8, %9 : vector<64x4xf32>
    %11 = vector.broadcast %2 : vector<1x4xf32> to vector<64x4xf32>
    %12 = arith.maximumf %11, %10 : vector<64x4xf32>
    %13 = vector.broadcast %3 : vector<1x4xf32> to vector<64x4xf32>
    %14 = arith.minimumf %13, %12 : vector<64x4xf32>
    %15 = arith.negf %14 : vector<64x4xf32>
    %16 = math.exp %15 : vector<64x4xf32>
    %cst_5 = arith.constant 1.000000e+00 : f32
    %17 = vector.broadcast %cst_5 : f32 to vector<64x4xf32>
    %18 = arith.addf %17, %16 : vector<64x4xf32>
    %19 = arith.divf %17, %18 : vector<64x4xf32>
    %20 = vector.broadcast %5 : vector<1x4xf32> to vector<64x4xf32>
    %21 = arith.mulf %20, %19 : vector<64x4xf32>
    %22 = vector.broadcast %4 : vector<1x4xf32> to vector<64x4xf32>
    %23 = arith.addf %22, %21 : vector<64x4xf32>
    %c0_6 = arith.constant 0 : index
    %c0_7 = arith.constant 0 : index
    %24 = vector.load %arg4[%c0_6, %c0_7] : memref<64x4xf32, #tpu.memory_space<vmem>>, vector<64x4xf32>
    tpu.vector_store %arg4[%c0_6, %c0_7], %23 {strides = array<i32>} : memref<64x4xf32, #tpu.memory_space<vmem>>, vector<64x4xf32>,
    return
  }
  func.func @transform_0(%arg0: i32) -> (i32, i32) {
    %c0_i32 = arith.constant 0 : i32
    %c0_i32_0 = arith.constant 0 : i32
    %c0_i32_1 = arith.constant 0 : i32
    return %c0_i32, %c0_i32_0 : i32, i32
  }
  func.func @transform_1(%arg0: i32) -> (i32, i32) {
    %c0_i32 = arith.constant 0 : i32
    %c0_i32_0 = arith.constant 0 : i32
    return %arg0, %c0_i32 : i32, i32
  }
  func.func @transform_2(%arg0: i32) -> (i32, i32) {
    %c0_i32 = arith.constant 0 : i32
    %c0_i32_0 = arith.constant 0 : i32
    %c0_i32_1 = arith.constant 0 : i32
    return %c0_i32, %c0_i32_0 : i32, i32
  }
  func.func @transform_3(%arg0: i32) -> (i32, i32) {
    %c0_i32 = arith.constant 0 : i32
    %c0_i32_0 = arith.constant 0 : i32
    return %arg0, %c0_i32 : i32, i32
  }
}

</mosaic_0001>

<llo_original>
// kernel: tpu_custom_call.1
$region0: #{tpu_custom_call.1}
  #allocation0 [shape = 'u32[]', space=smem, size = 0x4, offset = 0x4, fixed_abs, tag = 'smem constant byte address 0x4 - core index']
  #allocation1 [shape = 'u32[72,128]{1,0:T(1,128)}', space=vmem, size = 0x9000, scoped, tag = 'internal scratch']
  %s0 = inlined_call_operand.vmem [shape: f32[8,4], index: 0, kind: input, shape index: {}]
  %s1 = inlined_call_operand.vmem [shape: f32[128,64], index: 1, kind: input, shape index: {}]
  %s2 = inlined_call_operand.vmem [shape: f32[64,4], index: 2, kind: input, shape index: {}]
  %s3 = inlined_call_operand.vmem [shape: f32[128,4], index: 3, kind: output, shape index: {}]
  %s4 = sld [smem:[#allocation0]]
  $region45: #{tpu_custom_call.1} parent=0
    _
  %s6 = ssub.s32 1, %s4
  %s7 = scalar_select 0, %s6, %s4
  loop: start=0, step=1, limit=4
  $region2: #{tpu_custom_call.1} parent=0 // loop_pre_header
    _
  $region3: #{tpu_custom_call.1} parent=0 // loop_header
    %s9 = sphi 0, %s13
    %p10 = scmp.ge.s32.totalorder %s9, 4
    %s17 = sphi 0, %s17
    %s19 = sphi 0, %s17
    %s20 = sphi 0, %s19
    %s34 = sphi 0, %s20
    %s40 = sphi 0, %s42
    %s43 = sphi 0, %s40
    %s44 = sphi 0, %s43
    %s60 = sphi 0, %s44
    %s64 = sphi 0, %s64
    %s66 = sphi 0, %s64
    %s67 = sphi 0, %s66
    %s81 = sphi 0, %s67
    %s87 = sphi 0, %s89
    %s90 = sphi 0, %s87
    %s91 = sphi 0, %s90
    %s107 = sphi 0, %s91
  $region4: #{tpu_custom_call.1} parent=0 // loop_header_branch
    %12 = sbr.rel (%p10) target = $region8
  $region5: #{tpu_custom_call.1} parent=0 // loop_body
    %s14 = ssub.s32 %s9, 1
    %s15 = ssub.s32 %s9, 2
    %s16 = sadd.s32 %s9, 1
    %s18 = sadd.s32 %s17, 1
    %p21 = scmp.eq.s32.totalorder %s9, 1
    %p22 = scmp.ne.s32.totalorder %s17, %s19
    %p23 = scmp.eq.s32.totalorder %s9, 0
    %p24 = por %p22, %p23
    %p25 = scmp.ne.s32.totalorder %s17, %s19
    %p26 = scmp.eq.s32.totalorder %s14, 1
    %p27 = por %p25, %p26
    %p28 = scmp.ne.s32.totalorder %s19, %s20
    %p29 = scmp.eq.s32.totalorder %s14, 0
    %p30 = por %p28, %p29
    %p31 = scmp.ne.s32.totalorder %s19, %s20
    %p32 = scmp.eq.s32.totalorder %s15, 1
    %p33 = por %p31, %p32
    %p35 = scmp.ne.s32.totalorder %s20, %s34
    %p36 = scmp.eq.s32.totalorder %s15, 0
    %p37 = por %p35, %p36
    %s38 = ssub.s32 %s9, %s16
    %p39 = scmp.eq.s32.totalorder %s38, 0
    %s41 = sadd.s32 %s40, 1
    %s42 = scalar_select %p39, %s40, %s41
    %p45 = pneg %p39
    %p46 = scmp.eq.s32.totalorder %s9, 1
    %p47 = por %p45, %p46
    %p48 = scmp.ne.s32.totalorder %s40, %s43
    %p49 = scmp.eq.s32.totalorder %s9, 0
    %p50 = por %p48, %p49
    %p51 = scmp.ne.s32.totalorder %s40, %s43
    %p52 = scmp.eq.s32.totalorder %s14, 1
    %p53 = por %p51, %p52
    %p54 = scmp.ne.s32.totalorder %s43, %s44
    %p55 = scmp.eq.s32.totalorder %s14, 0
    %p56 = por %p54, %p55
    %p57 = scmp.ne.s32.totalorder %s43, %s44
    %p58 = scmp.eq.s32.totalorder %s15, 1
    %p59 = por %p57, %p58
    %p61 = scmp.ne.s32.totalorder %s44, %s60
    %p62 = scmp.eq.s32.totalorder %s15, 0
    %p63 = por %p61, %p62
    %s65 = sadd.s32 %s64, 1
    %p68 = scmp.eq.s32.totalorder %s9, 1
    %p69 = scmp.ne.s32.totalorder %s64, %s66
    %p70 = scmp.eq.s32.totalorder %s9, 0
    %p71 = por %p69, %p70
    %p72 = scmp.ne.s32.totalorder %s64, %s66
    %p73 = scmp.eq.s32.totalorder %s14, 1
    %p74 = por %p72, %p73
    %p75 = scmp.ne.s32.totalorder %s66, %s67
    %p76 = scmp.eq.s32.totalorder %s14, 0
    %p77 = por %p75, %p76
    %p78 = scmp.ne.s32.totalorder %s66, %s67
    %p79 = scmp.eq.s32.totalorder %s15, 1
    %p80 = por %p78, %p79
    %p82 = scmp.ne.s32.totalorder %s67, %s81
    %p83 = scmp.eq.s32.totalorder %s15, 0
    %p84 = por %p82, %p83
    %s85 = ssub.s32 %s9, %s16
    %p86 = scmp.eq.s32.totalorder %s85, 0
    %s88 = sadd.s32 %s87, 1
    %s89 = scalar_select %p86, %s87, %s88
    %p92 = pneg %p86
    %p93 = scmp.eq.s32.totalorder %s9, 1
    %p94 = por %p92, %p93
    %p95 = scmp.ne.s32.totalorder %s87, %s90
    %p96 = scmp.eq.s32.totalorder %s9, 0
    %p97 = por %p95, %p96
    %p98 = scmp.ne.s32.totalorder %s87, %s90
    %p99 = scmp.eq.s32.totalorder %s14, 1
    %p100 = por %p98, %p99
    %p101 = scmp.ne.s32.totalorder %s90, %s91
    %p102 = scmp.eq.s32.totalorder %s14, 0
    %p103 = por %p101, %p102
    %p104 = scmp.ne.s32.totalorder %s90, %s91
    %p105 = scmp.eq.s32.totalorder %s15, 1
    %p106 = por %p104, %p105
    %p108 = scmp.ne.s32.totalorder %s91, %s107
    %p109 = scmp.eq.s32.totalorder %s15, 0
    %p110 = por %p108, %p109
    %p111 = scmp.le.s32.totalorder 1, %s9
    %p112 = scmp.lt.s32.totalorder %s9, 3
    %p113 = pnand %p111, %p112
    %p114 = pneg %p113
    // Predicated region
    $region9: #{tpu_custom_call.1} parent=5 // pred_check
      _
    $region10: #{tpu_custom_call.1} parent=5 // pred_check_branch
      %116 = sbr.rel (%p113) target = $region12
    $region11: #{tpu_custom_call.1} parent=5 // pred_region
      %s117 = ssub.s32 %s9, 1
      // Predicated region
      $region13: #{tpu_custom_call.1} parent=11 // pred_check
        %p118 = pneg %p30
      $region14: #{tpu_custom_call.1} parent=11 // pred_check_branch
        %120 = sbr.rel (%p118) target = $region16
      $region15: #{tpu_custom_call.1} parent=11 // pred_region
        _
      $region16: #{tpu_custom_call.1} parent=11 // pred_fallthru
        _
      // Predicated region
      $region17: #{tpu_custom_call.1} parent=11 // pred_check
        %p121 = pneg %p77
      $region18: #{tpu_custom_call.1} parent=11 // pred_check_branch
        %123 = sbr.rel (%p121) target = $region20
      $region19: #{tpu_custom_call.1} parent=11 // pred_region
        _
      $region20: #{tpu_custom_call.1} parent=11 // pred_fallthru
        _
    $region12: #{tpu_custom_call.1} parent=5 // pred_fallthru
      _
    %p124 = scmp.lt.s32.totalorder %s9, 2
    // Predicated region
    $region21: #{tpu_custom_call.1} parent=5 // pred_check
      %p125 = pneg %p124
    $region22: #{tpu_custom_call.1} parent=5 // pred_check_branch
      %127 = sbr.rel (%p125) target = $region24
    $region23: #{tpu_custom_call.1} parent=5 // pred_region
      // Predicated region
      $region25: #{tpu_custom_call.1} parent=23 // pred_check
        %p128 = pneg %p50
      $region26: #{tpu_custom_call.1} parent=23 // pred_check_branch
        %130 = sbr.rel (%p128) target = $region28
      $region27: #{tpu_custom_call.1} parent=23 // pred_region
        %s131 = smul.u32 8, %s9
        %p132 = scmp.lt.s32.totalorder %s131, 15
        %s133 = scalar_select %p132, %s131, 15
        %s134 = smul.addr %s133, 8
        %s135 = scalar_lea.vmem %s1, %s134
        %s136 = smul.u32 8, %s9
      $region28: #{tpu_custom_call.1} parent=23 // pred_fallthru
        _
    $region24: #{tpu_custom_call.1} parent=5 // pred_fallthru
      _
    %p137 = scmp.le.s32.totalorder 1, %s9
    %p138 = scmp.lt.s32.totalorder %s9, 3
    %p139 = pnand %p137, %p138
    %p140 = pneg %p139
    // Predicated region
    $region29: #{tpu_custom_call.1} parent=5 // pred_check
      _
    $region30: #{tpu_custom_call.1} parent=5 // pred_check_branch
      %142 = sbr.rel (%p139) target = $region32
    $region31: #{tpu_custom_call.1} parent=5 // pred_region
      %s143 = ssub.s32 %s9, 1
      %p144 = pneg %p30
      %p145 = pneg %p27
      %s146 = smul.u32 8, %s14
      %p147 = scmp.lt.s32.totalorder %s146, 15
      %s148 = scalar_select %p147, %s146, 15
      %s149 = smul.addr %s148, 8
      %s150 = scalar_lea.vmem %s1, %s149
      %p151 = pneg %p56
      %p152 = pneg %p53
      %p153 = pneg %p77
      %p154 = pneg %p74
      %p155 = pneg %p103
      %p156 = pneg %p100
      %s157 = smul.u32 8, %s14
      %p158 = scmp.lt.s32.totalorder %s157, 15
      %s159 = scalar_select %p158, %s157, 15
      %s160 = smul.addr %s159, 8
      %s161 = scalar_lea.vmem %s3, %s160
      %s162 = smul.u32 8, %s14
      %p163 = scmp.lt.s32.totalorder %s162, 15
      %s164 = scalar_select %p163, %s162, 15
      %s165 = smul.addr %s164, 8
      %s166 = scalar_lea.vmem %s1, %s165
      %s167 = smul.u32 8, %s14
      %s168 = smul.u32 8, %s14
      %p169 = scmp.lt.s32.totalorder %s168, 15
      %s170 = scalar_select %p169, %s168, 15
      %s171 = smul.addr %s170, 8
      %s172 = scalar_lea.vmem %s3, %s171
      %s173 = smul.u32 8, %s14
      %v174 = vld [vmem:[%s0] sm:$0xff]
      %v175 = vld [vmem:[%s166] sm:$0xff]
      %v176 = vld [vmem:[%s166 + $0x8] sm:$0xff]
      %v177 = vld [vmem:[%s166 + $0x10] sm:$0xff]
      %v178 = vld [vmem:[%s166 + $0x18] sm:$0xff]
      %v179 = vld [vmem:[%s166 + $0x20] sm:$0xff]
      %v180 = vld [vmem:[%s166 + $0x28] sm:$0xff]
      %v181 = vld [vmem:[%s166 + $0x30] sm:$0xff]
      %v182 = vld [vmem:[%s166 + $0x38] sm:$0xff]
      %v183 = vld [vmem:[%s2] sm:$0xff]
      %v184 = vld [vmem:[%s2 + $0x8] sm:$0xff]
      %v185 = vld [vmem:[%s2 + $0x10] sm:$0xff]
      %v186 = vld [vmem:[%s2 + $0x18] sm:$0xff]
      %v187 = vld [vmem:[%s2 + $0x20] sm:$0xff]
      %v188 = vld [vmem:[%s2 + $0x28] sm:$0xff]
      %v189 = vld [vmem:[%s2 + $0x30] sm:$0xff]
      %v190 = vld [vmem:[%s2 + $0x38] sm:$0xff]
      %v191 = vperm.slane %v174, 0
      %vm192 = vcmask 523264
      %v194 = vsel %vm192, %v175, 0
      %v197 = vsel %vm192, %v176, 0
      %v200 = vsel %vm192, %v177, 0
      %v203 = vsel %vm192, %v178, 0
      %v206 = vsel %vm192, %v179, 0
      %v209 = vsel %vm192, %v180, 0
      %v212 = vsel %vm192, %v181, 0
      %v215 = vsel %vm192, %v182, 0
      %217 = vmatpush.msra.mxu0 0.0
      %218 = vmatpush.msra.mxu0 0.0
      %219 = vmatpush.msra.mxu0 0.0
      %220 = vmatpush.msra.mxu0 0.0
      %221 = vmatpush.msra.mxu0 0.0
      %222 = vmatpush.msra.mxu0 0.0
      %223 = vmatpush.msra.mxu0 0.0
      %224 = vmatpush.msra.mxu0 0.0
      %225 = vmatpush.msra.mxu0 %v190
      %226 = vmatpush.msra.mxu0 %v189
      %227 = vmatpush.msra.mxu0 %v188
      %228 = vmatpush.msra.mxu0 %v187
      %229 = vmatpush.msra.mxu0 %v186
      %230 = vmatpush.msra.mxu0 %v185
      %231 = vmatpush.msra.mxu0 %v184
      %232 = vmatpush.msra.mxu0 %v183
      %233 = vmatmul.f32.gmra.mxu0 %v194
      %v234 = vpop.f32.mrf.mxu0
      %v235 = vadd.f32 %v191, %v234
      %236 = vmatmul.f32.gmra.mxu0 %v197
      %v237 = vpop.f32.mrf.mxu0
      %v238 = vadd.f32 %v191, %v237
      %239 = vmatmul.f32.gmra.mxu0 %v200
      %v240 = vpop.f32.mrf.mxu0
      %v241 = vadd.f32 %v191, %v240
      %242 = vmatmul.f32.gmra.mxu0 %v203
      %v243 = vpop.f32.mrf.mxu0
      %v244 = vadd.f32 %v191, %v243
      %245 = vmatmul.f32.gmra.mxu0 %v206
      %v246 = vpop.f32.mrf.mxu0
      %v247 = vadd.f32 %v191, %v246
      %248 = vmatmul.f32.gmra.mxu0 %v209
      %v249 = vpop.f32.mrf.mxu0
      %v250 = vadd.f32 %v191, %v249
      %251 = vmatmul.f32.gmra.mxu0 %v212
      %v252 = vpop.f32.mrf.mxu0
      %v253 = vadd.f32 %v191, %v252
      %254 = vmatmul.f32.gmra.mxu0 %v215
      %v255 = vpop.f32.mrf.mxu0
      %v256 = vadd.f32 %v191, %v255
      %257 = vdwg.mxu0
      %v258 = vperm.slane %v174, 1
      %v259 = vmax.f32 %v258, %v235
      %v260 = vmax.f32 %v258, %v238
      %v261 = vmax.f32 %v258, %v241
      %v262 = vmax.f32 %v258, %v244
      %v263 = vmax.f32 %v258, %v247
      %v264 = vmax.f32 %v258, %v250
      %v265 = vmax.f32 %v258, %v253
      %v266 = vmax.f32 %v258, %v256
      %v267 = vperm.slane %v174, 2
      %v268 = vmin.f32 %v267, %v259
      %v269 = vmin.f32 %v267, %v260
      %v270 = vmin.f32 %v267, %v261
      %v271 = vmin.f32 %v267, %v262
      %v272 = vmin.f32 %v267, %v263
      %v273 = vmin.f32 %v267, %v264
      %v274 = vmin.f32 %v267, %v265
      %v275 = vmin.f32 %v267, %v266
      %v276 = vxor.u32 %v268, 2147483648
      %v277 = vxor.u32 %v269, 2147483648
      %v278 = vxor.u32 %v270, 2147483648
      %v279 = vxor.u32 %v271, 2147483648
      %v280 = vxor.u32 %v272, 2147483648
      %v281 = vxor.u32 %v273, 2147483648
      %v282 = vxor.u32 %v274, 2147483648
      %v283 = vxor.u32 %v275, 2147483648
      %v284 = vmul.f32 %v276, 1.442695
      %v285 = vpow.pop %v284
      %v286 = vmul.f32 %v277, 1.442695
      %v287 = vpow.pop %v286
      %v288 = vmul.f32 %v278, 1.442695
      %v289 = vpow.pop %v288
      %v290 = vmul.f32 %v279, 1.442695
      %v291 = vpow.pop %v290
      %v292 = vmul.f32 %v280, 1.442695
      %v293 = vpow.pop %v292
      %v294 = vmul.f32 %v281, 1.442695
      %v295 = vpow.pop %v294
      %v296 = vmul.f32 %v282, 1.442695
      %v297 = vpow.pop %v296
      %v298 = vmul.f32 %v283, 1.442695
      %v299 = vpow.pop %v298
      %v300 = vadd.f32 %v285, 1.0
      %v301 = vadd.f32 %v287, 1.0
      %v302 = vadd.f32 %v289, 1.0
      %v303 = vadd.f32 %v291, 1.0
      %v304 = vadd.f32 %v293, 1.0
      %v305 = vadd.f32 %v295, 1.0
      %v306 = vadd.f32 %v297, 1.0
      %v307 = vadd.f32 %v299, 1.0
      %v308 = vrcp.pop %v300
      %v309 = vmul.f32 %v300, %v308
      %v310 = vsub.f32 1.0, %v309
      %v311 = vmul.f32 %v308, %v310
      %v312 = vadd.f32 %v308, %v311
      %vm313 = vweird.f32 %v300
      %vm314 = vweird.f32 %v308
      %vm315 = vmor %vm313, %vm314
      %v316 = vsel %vm315, %v308, %v312
      %v317 = vand.u32 2147483647, %v300
      %vm318 = vcmp.eq.f32.partialorder %v317, 8.507059e+37
      %v319 = vand.u32 %v300, 2147483648
      %v320 = vor.u32 1.1754944e-38, %v319
      %v321 = vsel %vm318, %v320, %v316
      %v322 = vmul.f32 1.0, %v321
      %v323 = vrcp.pop %v301
      %v324 = vmul.f32 %v301, %v323
      %v325 = vsub.f32 1.0, %v324
      %v326 = vmul.f32 %v323, %v325
      %v327 = vadd.f32 %v323, %v326
      %vm328 = vweird.f32 %v301
      %vm329 = vweird.f32 %v323
      %vm330 = vmor %vm328, %vm329
      %v331 = vsel %vm330, %v323, %v327
      %v332 = vand.u32 2147483647, %v301
      %vm333 = vcmp.eq.f32.partialorder %v332, 8.507059e+37
      %v334 = vand.u32 %v301, 2147483648
      %v335 = vor.u32 1.1754944e-38, %v334
      %v336 = vsel %vm333, %v335, %v331
      %v337 = vmul.f32 1.0, %v336
      %v338 = vrcp.pop %v302
      %v339 = vmul.f32 %v302, %v338
      %v340 = vsub.f32 1.0, %v339
      %v341 = vmul.f32 %v338, %v340
      %v342 = vadd.f32 %v338, %v341
      %vm343 = vweird.f32 %v302
      %vm344 = vweird.f32 %v338
      %vm345 = vmor %vm343, %vm344
      %v346 = vsel %vm345, %v338, %v342
      %v347 = vand.u32 2147483647, %v302
      %vm348 = vcmp.eq.f32.partialorder %v347, 8.507059e+37
      %v349 = vand.u32 %v302, 2147483648
      %v350 = vor.u32 1.1754944e-38, %v349
      %v351 = vsel %vm348, %v350, %v346
      %v352 = vmul.f32 1.0, %v351
      %v353 = vrcp.pop %v303
      %v354 = vmul.f32 %v303, %v353
      %v355 = vsub.f32 1.0, %v354
      %v356 = vmul.f32 %v353, %v355
      %v357 = vadd.f32 %v353, %v356
      %vm358 = vweird.f32 %v303
      %vm359 = vweird.f32 %v353
      %vm360 = vmor %vm358, %vm359
      %v361 = vsel %vm360, %v353, %v357
      %v362 = vand.u32 2147483647, %v303
      %vm363 = vcmp.eq.f32.partialorder %v362, 8.507059e+37
      %v364 = vand.u32 %v303, 2147483648
      %v365 = vor.u32 1.1754944e-38, %v364
      %v366 = vsel %vm363, %v365, %v361
      %v367 = vmul.f32 1.0, %v366
      %v368 = vrcp.pop %v304
      %v369 = vmul.f32 %v304, %v368
      %v370 = vsub.f32 1.0, %v369
      %v371 = vmul.f32 %v368, %v370
      %v372 = vadd.f32 %v368, %v371
      %vm373 = vweird.f32 %v304
      %vm374 = vweird.f32 %v368
      %vm375 = vmor %vm373, %vm374
      %v376 = vsel %vm375, %v368, %v372
      %v377 = vand.u32 2147483647, %v304
      %vm378 = vcmp.eq.f32.partialorder %v377, 8.507059e+37
      %v379 = vand.u32 %v304, 2147483648
      %v380 = vor.u32 1.1754944e-38, %v379
      %v381 = vsel %vm378, %v380, %v376
      %v382 = vmul.f32 1.0, %v381
      %v383 = vrcp.pop %v305
      %v384 = vmul.f32 %v305, %v383
      %v385 = vsub.f32 1.0, %v384
      %v386 = vmul.f32 %v383, %v385
      %v387 = vadd.f32 %v383, %v386
      %vm388 = vweird.f32 %v305
      %vm389 = vweird.f32 %v383
      %vm390 = vmor %vm388, %vm389
      %v391 = vsel %vm390, %v383, %v387
      %v392 = vand.u32 2147483647, %v305
      %vm393 = vcmp.eq.f32.partialorder %v392, 8.507059e+37
      %v394 = vand.u32 %v305, 2147483648
      %v395 = vor.u32 1.1754944e-38, %v394
      %v396 = vsel %vm393, %v395, %v391
      %v397 = vmul.f32 1.0, %v396
      %v398 = vrcp.pop %v306
      %v399 = vmul.f32 %v306, %v398
      %v400 = vsub.f32 1.0, %v399
      %v401 = vmul.f32 %v398, %v400
      %v402 = vadd.f32 %v398, %v401
      %vm403 = vweird.f32 %v306
      %vm404 = vweird.f32 %v398
      %vm405 = vmor %vm403, %vm404
      %v406 = vsel %vm405, %v398, %v402
      %v407 = vand.u32 2147483647, %v306
      %vm408 = vcmp.eq.f32.partialorder %v407, 8.507059e+37
      %v409 = vand.u32 %v306, 2147483648
      %v410 = vor.u32 1.1754944e-38, %v409
      %v411 = vsel %vm408, %v410, %v406
      %v412 = vmul.f32 1.0, %v411
      %v413 = vrcp.pop %v307
      %v414 = vmul.f32 %v307, %v413
      %v415 = vsub.f32 1.0, %v414
      %v416 = vmul.f32 %v413, %v415
      %v417 = vadd.f32 %v413, %v416
      %vm418 = vweird.f32 %v307
      %vm419 = vweird.f32 %v413
      %vm420 = vmor %vm418, %vm419
      %v421 = vsel %vm420, %v413, %v417
      %v422 = vand.u32 2147483647, %v307
      %vm423 = vcmp.eq.f32.partialorder %v422, 8.507059e+37
      %v424 = vand.u32 %v307, 2147483648
      %v425 = vor.u32 1.1754944e-38, %v424
      %v426 = vsel %vm423, %v425, %v421
      %v427 = vmul.f32 1.0, %v426
      %v428 = vperm.slane %v174, 4
      %v429 = vmul.f32 %v428, %v322
      %v430 = vmul.f32 %v428, %v337
      %v431 = vmul.f32 %v428, %v352
      %v432 = vmul.f32 %v428, %v367
      %v433 = vmul.f32 %v428, %v382
      %v434 = vmul.f32 %v428, %v397
      %v435 = vmul.f32 %v428, %v412
      %v436 = vmul.f32 %v428, %v427
      %v437 = vperm.slane %v174, 3
      %v438 = vadd.f32 %v437, %v429
      %v439 = vadd.f32 %v437, %v430
      %v440 = vadd.f32 %v437, %v431
      %v441 = vadd.f32 %v437, %v432
      %v442 = vadd.f32 %v437, %v433
      %v443 = vadd.f32 %v437, %v434
      %v444 = vadd.f32 %v437, %v435
      %v445 = vadd.f32 %v437, %v436
      %vm446 = vcmask 31744
      %447 = vst.msk [vmem:[%s172] sm:$0xff] %vm446, %v438
      %448 = vst.msk [vmem:[%s172 + $0x8] sm:$0xff] %vm446, %v439
      %449 = vst.msk [vmem:[%s172 + $0x10] sm:$0xff] %vm446, %v440
      %450 = vst.msk [vmem:[%s172 + $0x18] sm:$0xff] %vm446, %v441
      %451 = vst.msk [vmem:[%s172 + $0x20] sm:$0xff] %vm446, %v442
      %452 = vst.msk [vmem:[%s172 + $0x28] sm:$0xff] %vm446, %v443
      %453 = vst.msk [vmem:[%s172 + $0x30] sm:$0xff] %vm446, %v444
      %454 = vst.msk [vmem:[%s172 + $0x38] sm:$0xff] %vm446, %v445
      %s455 = smul.u32 8, %s14
      %p456 = scmp.lt.s32.totalorder %s455, 15
      %s457 = scalar_select %p456, %s455, 15
      %s458 = smul.addr %s457, 8
      %s459 = scalar_lea.vmem %s3, %s458
      // Predicated region
      $region33: #{tpu_custom_call.1} parent=31 // pred_check
        %p460 = pneg %p100
      $region34: #{tpu_custom_call.1} parent=31 // pred_check_branch
        %462 = sbr.rel (%p460) target = $region36
      $region35: #{tpu_custom_call.1} parent=31 // pred_region
        %s463 = smul.u32 8, %s14
      $region36: #{tpu_custom_call.1} parent=31 // pred_fallthru
        _
    $region32: #{tpu_custom_call.1} parent=5 // pred_fallthru
      _
    %p464 = scmp.le.s32.totalorder 2, %s9
    // Predicated region
    $region37: #{tpu_custom_call.1} parent=5 // pred_check
      %p465 = pneg %p464
    $region38: #{tpu_custom_call.1} parent=5 // pred_check_branch
      %467 = sbr.rel (%p465) target = $region40
    $region39: #{tpu_custom_call.1} parent=5 // pred_region
      %s468 = ssub.s32 %s9, 2
      // Predicated region
      $region41: #{tpu_custom_call.1} parent=39 // pred_check
        %p469 = pneg %p106
      $region42: #{tpu_custom_call.1} parent=39 // pred_check_branch
        %471 = sbr.rel (%p469) target = $region44
      $region43: #{tpu_custom_call.1} parent=39 // pred_region
        %s472 = smul.u32 8, %s15
        %p473 = scmp.lt.s32.totalorder %s472, 15
        %s474 = scalar_select %p473, %s472, 15
        %s475 = smul.addr %s474, 8
        %s476 = scalar_lea.vmem %s3, %s475
      $region44: #{tpu_custom_call.1} parent=39 // pred_fallthru
        _
    $region40: #{tpu_custom_call.1} parent=5 // pred_fallthru
      _
  $region6: #{tpu_custom_call.1} parent=0 // loop_footer
    %s13 = sadd.s32 1, %s9
  $region7: #{tpu_custom_call.1} parent=0 // loop_footer_branch
    %8 = sbr.rel target = $region3
  $region8: #{tpu_custom_call.1} parent=0 // loop_exit
    _

</llo_original>
